<compile_context>
chip_gen: v5e
topology: v5e:2x2
jax: 0.10.0
libtpu: 0.0.40
codegen_flags: <defaults>
</compile_context>

<pallas_src>
import functools

import jax
import jax.numpy as jnp
from jax import lax
from jax.experimental import pallas as pl
from jax.experimental.pallas import tpu as pltpu


def _round_up(x, m):
    return ((x + m - 1) // m) * m


def mlp_kernel(x_ref, w1_ref, b1_ref, w2_ref, b2_ref, w3_ref, b3_ref, o_ref):
    """One batch tile. x_ref: (TILE_B, IN) native layout; o_ref: (1, TILE_B)."""
    x = x_ref[...].astype(w1_ref.dtype)

    # Layer 1: h1^T = W1 @ x^T -> (H1, TILE_B).  Contraction is over x's last
    # dim, so no host- or VMEM-side transpose of the big activation tile.
    h1 = lax.dot_general(
        w1_ref[...], x, (((1,), (1,)), ((), ())),
        preferred_element_type=jnp.float32)
    h1 = jnp.maximum(h1 + b1_ref[...], 0.0)      # bias/ReLU in f32 (v5e-safe)
    # Dropout(p=0.2) -> identity in eval mode.

    # Layer 2: (H2, H1) @ (H1, TILE_B) -> (H2, TILE_B), f32 accumulation.
    h2 = jnp.dot(w2_ref[...], h1.astype(w2_ref.dtype),
                 preferred_element_type=jnp.float32)
    h2 = jnp.maximum(h2 + b2_ref[...], 0.0)
    # Dropout(p=0.2) -> identity in eval mode.

    # Layer 3: 1-wide output -> VPU multiply + sublane reduce instead of a
    # 1-lane MXU matmul; keeps the (1, TILE_B) store lane-dense.
    w3 = w3_ref[...].astype(jnp.float32)
    logits = jnp.sum(h2 * w3, axis=0, keepdims=True) + b3_ref[0, 0]
    o_ref[...] = jax.nn.sigmoid(logits)


def _pick_tile(batch, x_itemsize):
    """Lane-dense batch tile: >=2 grid steps when possible (v7x megacore),
    capped so the double-buffered, lane-padded x block (TILE_B*128*itemsize*2)
    plus ~200 B/col of f32 intermediates fit comfortably in a 48 MiB VMEM
    budget (safe on v7x's 64 MiB physical VMEM)."""
    cap = 16384 if x_itemsize >= 4 else 32768
    tile = _round_up(pl.cdiv(batch, 2), 128)
    return max(128, min(cap, tile))


@functools.partial(jax.jit, static_argnames=("tile_b", "compute_dtype"))
def loan_matching_forward(x, params, *, tile_b=None, compute_dtype=jnp.float32):
    """x: (B, input_size). Returns (B,) — matches .squeeze() in PyTorch.

    Weights use PyTorch (out_features, in_features) layout; the kernel computes
    y^T = sigmoid(w3 . relu(W2 @ relu(W1 @ x^T))) with the batch on the lane axis.
    """
    w1, b1, w2, b2, w3, b3 = params
    B, IN = x.shape
    H1, H2 = w1.shape[0], w2.shape[0]

    if tile_b is None:
        tile_b = _pick_tile(B, jnp.dtype(x.dtype).itemsize)
    else:
        tile_b = max(128, _round_up(int(tile_b), 128))
    grid = (pl.cdiv(B, tile_b),)

    # Weight casts are tiny (one-time, KiB-scale).  x is NOT cast on the host —
    # a host cast would be an extra full HBM pass; pass bf16 x upstream to
    # actually halve the dominant read.
    w1c = w1.astype(compute_dtype)
    w2c = w2.astype(compute_dtype)
    w3c = w3.astype(compute_dtype)

    const = lambda shape: pl.BlockSpec(shape, lambda i: tuple(0 for _ in shape))

    cost = pl.CostEstimate(
        flops=2 * B * (H1 * IN + H2 * H1 + H2),
        transcendentals=B,  # one sigmoid per example
        bytes_accessed=(x.size * x.dtype.itemsize + B * 4
                        + (w1c.size + w2c.size + w3c.size)
                        * jnp.dtype(compute_dtype).itemsize),
    )

    # TODO(synk): if tile caps are ever raised past ~64K cols, add an inner
    # unrolled fori_loop over 512-col sub-chunks so h1/h2 stay in vregs.
    out = pl.pallas_call(
        mlp_kernel,
        out_shape=jax.ShapeDtypeStruct((1, B), jnp.float32),
        grid=grid,
        in_specs=[
            # x: native (B, IN) layout, contiguous row DMA, partial tail block.
            pl.BlockSpec((tile_b, IN), lambda i: (i, 0)),
            const((H1, IN)),                                 # weights/biases:
            const((H1, 1)),                                  # VMEM-resident
            const((H2, H1)),
            const((H2, 1)),
            const((H2, 1)),
            pl.BlockSpec(memory_space=pltpu.MemorySpace.SMEM),  # scalar b3
        ],
        out_specs=pl.BlockSpec((1, tile_b), lambda i: (0, i)),  # lane-dense store
        compiler_params=pltpu.CompilerParams(
            dimension_semantics=("parallel",),
            vmem_limit_bytes=48 * 1024 * 1024,
        ),
        cost_estimate=cost,
    )(x, w1c, b1, w2c, b2, w3c, b3)

    return out[0]  # (B,) — drop the leading 1 + .squeeze()


def xavier_uniform(key, fan_out, fan_in):
    bound = jnp.sqrt(6.0 / (fan_in + fan_out))
    # PyTorch nn.Linear weight layout: (out_features, in_features).
    return jax.random.uniform(
        key, (fan_out, fan_in), dtype=jnp.float32, minval=-bound, maxval=bound)


def init_params(key, input_size, hidden_size=32):
    h2 = hidden_size // 2
    k1, k2, k3 = jax.random.split(key, 3)
    w1 = xavier_uniform(k1, hidden_size, input_size)
    b1 = jnp.zeros((hidden_size, 1), jnp.float32)
    w2 = xavier_uniform(k2, h2, hidden_size)
    b2 = jnp.zeros((h2, 1), jnp.float32)
    w3 = xavier_uniform(k3, 1, h2).reshape(h2, 1)     # stored as a column
    b3 = jnp.zeros((1, 1), jnp.float32)
    return (w1, b1, w2, b2, w3, b3)


def reference_forward(x, params):
    w1, b1, w2, b2, w3, b3 = params
    x = x.astype(jnp.float32)
    h1 = jnp.maximum(x @ w1.T + b1[:, 0], 0.0)
    h2 = jnp.maximum(h1 @ w2.T + b2[:, 0], 0.0)
    return jax.nn.sigmoid(h2 @ w3 + b3[0])[:, 0]


if __name__ == "__main__":
    key = jax.random.PRNGKey(0)
    kx, kp, kx2 = jax.random.split(key, 3)

    B, INPUT_SIZE, HIDDEN = 8, 16, 32
    x = jax.random.normal(kx, (B, INPUT_SIZE), dtype=jnp.float32)
    params = init_params(kp, INPUT_SIZE, HIDDEN)

    # f32 path (single partial tile), tight tolerance.
    y = jax.block_until_ready(loan_matching_forward(x, params))
    y_ref = reference_forward(x, params)
    assert y.shape == (B,), y.shape
    assert jnp.allclose(y, y_ref, atol=1e-5, rtol=1e-5), (y, y_ref)

    # Multi-step grid + partial tail block (B not a multiple of the tile);
    # auto tile -> 256 cols, 2 grid steps.
    B2 = 300
    x2 = jax.random.normal(kx2, (B2, INPUT_SIZE), dtype=jnp.float32)
    y2 = jax.block_until_ready(loan_matching_forward(x2, params))
    y2_ref = reference_forward(x2, params)
    assert y2.shape == (B2,), y2.shape
    assert jnp.allclose(y2, y2_ref, atol=1e-5, rtol=1e-5)

    # Explicit small-tile override path (3 grid steps).
    y2b = jax.block_until_ready(loan_matching_forward(x2, params, tile_b=128))
    assert jnp.allclose(y2b, y2_ref, atol=1e-5, rtol=1e-5)

    # bf16 activation + weight stream (halves the dominant HBM read on
    # v6e/v7x); f32 accumulation/elementwise, loose tolerance.
    y_bf16 = jax.block_until_ready(
        loan_matching_forward(x.astype(jnp.bfloat16), params,
                              compute_dtype=jnp.bfloat16))
    assert jnp.allclose(y_bf16, y_ref, atol=2e-2, rtol=2e-2), (y_bf16, y_ref)

    print("KERNEL_OK")
</pallas_src>

<mosaic_0001>
module attributes {stable_mosaic.version = 11 : i64} {
  func.func @mlp_kernel(%arg0: i32, %arg1: memref<128x16xf32, #tpu.memory_space<vmem>>, %arg2: memref<32x16xf32, #tpu.memory_space<vmem>>, %arg3: memref<32x1xf32, #tpu.memory_space<vmem>>, %arg4: memref<16x32xf32, #tpu.memory_space<vmem>>, %arg5: memref<16x1xf32, #tpu.memory_space<vmem>>, %arg6: memref<16x1xf32, #tpu.memory_space<vmem>>, %arg7: memref<1x1xf32, #tpu.memory_space<smem>>, %arg8: memref<1x128xf32, #tpu.memory_space<vmem>>) attributes {dimension_semantics = [#tpu.dimension_semantics<parallel>], iteration_bounds = array<i64: 1>, scalar_prefetch = 0 : i64, scratch_operands = 0 : i64, tpu.core_type = #tpu.core_type<tc>, window_params = [{transform_indices = @transform_0, window_bounds = array<i64: 128, 16>}, {pipeline_mode = #tpu.pipeline_mode<synchronous>, transform_indices = @transform_1, window_bounds = array<i64: 32, 16>}, {pipeline_mode = #tpu.pipeline_mode<synchronous>, transform_indices = @transform_2, window_bounds = array<i64: 32, 1>}, {pipeline_mode = #tpu.pipeline_mode<synchronous>, transform_indices = @transform_3, window_bounds = array<i64: 16, 32>}, {pipeline_mode = #tpu.pipeline_mode<synchronous>, transform_indices = @transform_4, window_bounds = array<i64: 16, 1>}, {pipeline_mode = #tpu.pipeline_mode<synchronous>, transform_indices = @transform_5, window_bounds = array<i64: 16, 1>}, {transform_indices = @transform_6, window_bounds = array<i64: 1, 1>}, {transform_indices = @transform_7, window_bounds = array<i64: 1, 128>}]} {
    %c0 = arith.constant 0 : index
    %c0_0 = arith.constant 0 : index
    %0 = vector.load %arg1[%c0, %c0_0] : memref<128x16xf32, #tpu.memory_space<vmem>>, vector<128x16xf32>
    %c0_1 = arith.constant 0 : index
    %c0_2 = arith.constant 0 : index
    %1 = vector.load %arg2[%c0_1, %c0_2] : memref<32x16xf32, #tpu.memory_space<vmem>>, vector<32x16xf32>
    %cst = arith.constant dense<0.000000e+00> : vector<32x128xf32>
    %2 = tpu.matmul %1, %0, %cst {dimension_numbers = #tpu.dot_dimension_numbers<[1], [1], [0], [0], [0, 0, 1, 0], [], []>} : vector<32x16xf32>, vector<128x16xf32>, vector<32x128xf32> -> vector<32x128xf32>
    %c0_3 = arith.constant 0 : index
    %c0_4 = arith.constant 0 : index
    %3 = vector.load %arg3[%c0_3, %c0_4] : memref<32x1xf32, #tpu.memory_space<vmem>>, vector<32x1xf32>
    %4 = vector.broadcast %3 : vector<32x1xf32> to vector<32x128xf32>
    %5 = arith.addf %2, %4 : vector<32x128xf32>
    %cst_5 = arith.constant 0.000000e+00 : f32
    %6 = vector.broadcast %cst_5 : f32 to vector<32x128xf32>
    %7 = arith.maximumf %5, %6 : vector<32x128xf32>
    %c0_6 = arith.constant 0 : index
    %c0_7 = arith.constant 0 : index
    %8 = vector.load %arg4[%c0_6, %c0_7] : memref<16x32xf32, #tpu.memory_space<vmem>>, vector<16x32xf32>
    %cst_8 = arith.constant dense<0.000000e+00> : vector<16x128xf32>
    %9 = tpu.matmul %8, %7, %cst_8 {dimension_numbers = #tpu.dot_dimension_numbers<[1], [0], [0], [1], [0, 0, 1, 1], [], []>} : vector<16x32xf32>, vector<32x128xf32>, vector<16x128xf32> -> vector<16x128xf32>
    %c0_9 = arith.constant 0 : index
    %c0_10 = arith.constant 0 : index
    %10 = vector.load %arg5[%c0_9, %c0_10] : memref<16x1xf32, #tpu.memory_space<vmem>>, vector<16x1xf32>
    %11 = vector.broadcast %10 : vector<16x1xf32> to vector<16x128xf32>
    %12 = arith.addf %9, %11 : vector<16x128xf32>
    %cst_11 = arith.constant 0.000000e+00 : f32
    %13 = vector.broadcast %cst_11 : f32 to vector<16x128xf32>
    %14 = arith.maximumf %12, %13 : vector<16x128xf32>
    %c0_12 = arith.constant 0 : index
    %c0_13 = arith.constant 0 : index
    %15 = vector.load %arg6[%c0_12, %c0_13] : memref<16x1xf32, #tpu.memory_space<vmem>>, vector<16x1xf32>
    %16 = vector.broadcast %15 : vector<16x1xf32> to vector<16x128xf32>
    %17 = arith.mulf %14, %16 : vector<16x128xf32>
    %cst_14 = arith.constant dense<0.000000e+00> : vector<128xf32>
    %18 = vector.multi_reduction <add>, %17, %cst_14 [0] : vector<16x128xf32> to vector<128xf32>
    %19 = vector.shape_cast %18 : vector<128xf32> to vector<1x128xf32>
    %c0_15 = arith.constant 0 : index
    %c0_16 = arith.constant 0 : index
    %20 = memref.load %arg7[%c0_15, %c0_16] : memref<1x1xf32, #tpu.memory_space<smem>>
    %21 = vector.broadcast %20 : f32 to vector<1x128xf32>
    %22 = arith.addf %19, %21 : vector<1x128xf32>
    %23 = arith.negf %22 : vector<1x128xf32>
    %24 = math.exp %23 : vector<1x128xf32>
    %cst_17 = arith.constant 1.000000e+00 : f32
    %25 = vector.broadcast %cst_17 : f32 to vector<1x128xf32>
    %26 = arith.addf %25, %24 : vector<1x128xf32>
    %27 = arith.divf %25, %26 : vector<1x128xf32>
    %c0_18 = arith.constant 0 : index
    %c0_19 = arith.constant 0 : index
    %28 = vector.load %arg8[%c0_18, %c0_19] : memref<1x128xf32, #tpu.memory_space<vmem>>, vector<1x128xf32>
    tpu.vector_store %arg8[%c0_18, %c0_19], %27 {strides = array<i32>} : memref<1x128xf32, #tpu.memory_space<vmem>>, vector<1x128xf32>,
    return
  }
  func.func @transform_0(%arg0: i32) -> (i32, i32) {
    %c0_i32 = arith.constant 0 : i32
    %c0_i32_0 = arith.constant 0 : i32
    return %arg0, %c0_i32 : i32, i32
  }
  func.func @transform_1(%arg0: i32) -> (i32, i32) {
    %c0_i32 = arith.constant 0 : i32
    %c0_i32_0 = arith.constant 0 : i32
    %c0_i32_1 = arith.constant 0 : i32
    return %c0_i32, %c0_i32_0 : i32, i32
  }
  func.func @transform_2(%arg0: i32) -> (i32, i32) {
    %c0_i32 = arith.constant 0 : i32
    %c0_i32_0 = arith.constant 0 : i32
    %c0_i32_1 = arith.constant 0 : i32
    return %c0_i32, %c0_i32_0 : i32, i32
  }
  func.func @transform_3(%arg0: i32) -> (i32, i32) {
    %c0_i32 = arith.constant 0 : i32
    %c0_i32_0 = arith.constant 0 : i32
    %c0_i32_1 = arith.constant 0 : i32
    return %c0_i32, %c0_i32_0 : i32, i32
  }
  func.func @transform_4(%arg0: i32) -> (i32, i32) {
    %c0_i32 = arith.constant 0 : i32
    %c0_i32_0 = arith.constant 0 : i32
    %c0_i32_1 = arith.constant 0 : i32
    return %c0_i32, %c0_i32_0 : i32, i32
  }
  func.func @transform_5(%arg0: i32) -> (i32, i32) {
    %c0_i32 = arith.constant 0 : i32
    %c0_i32_0 = arith.constant 0 : i32
    %c0_i32_1 = arith.constant 0 : i32
    return %c0_i32, %c0_i32_0 : i32, i32
  }
  func.func @transform_6(%arg0: i32) -> (i32, i32) {
    %c0_i32 = arith.constant 0 : i32
    %c0_i32_0 = arith.constant 0 : i32
    %c0_i32_1 = arith.constant 0 : i32
    return %c0_i32, %c0_i32_0 : i32, i32
  }
  func.func @transform_7(%arg0: i32) -> (i32, i32) {
    %c0_i32 = arith.constant 0 : i32
    %c0_i32_0 = arith.constant 0 : i32
    return %c0_i32, %arg0 : i32, i32
  }
}

</mosaic_0001>

<llo_original>
// kernel: loan_matching_forward.1
$region0: #{loan_matching_forward.1}
  #allocation0 [shape = 'u32[]', space=smem, size = 0x4, offset = 0x4, fixed_abs, tag = 'smem constant byte address 0x4 - core index']
  #allocation1 [shape = 'u32[72,128]{1,0:T(1,128)}', space=vmem, size = 0x9000, scoped, tag = 'internal scratch']
  #allocation2 [shape = 'f32[1,1]{1,0:T(1,128)S(6)}', space=smem, size = 0x200, scoped, tag = 'scoped memory for loan_matching_forward.1']
  %s0 = inlined_call_operand.vmem [shape: f32[8,16], index: 0, kind: input, shape index: {}]
  %s1 = inlined_call_operand.vmem [shape: f32[32,16], index: 1, kind: input, shape index: {}]
  %s2 = inlined_call_operand.vmem [shape: f32[32,1], index: 2, kind: input, shape index: {}]
  %s3 = inlined_call_operand.vmem [shape: f32[16,32], index: 3, kind: input, shape index: {}]
  %s4 = inlined_call_operand.vmem [shape: f32[16,1], index: 4, kind: input, shape index: {}]
  %s5 = inlined_call_operand.vmem [shape: f32[16,1], index: 5, kind: input, shape index: {}]
  %s6 = inlined_call_operand.<no memory space> [shape: f32[1,1], index: 6, kind: input, shape index: {}]
  %s7 = inlined_call_operand.hbm [shape: f32[1,8], index: 7, kind: output, shape index: {}]
  %s8 = sld [smem:[#allocation0]]
  $region38: #{loan_matching_forward.1} parent=0
    _
  %s10 = ssub.s32 1, %s8
  %s11 = scalar_select 0, %s10, %s8
  %12 = sst [smem:[#allocation2]] %s6
  $region1: #{loan_matching_forward.1} parent=0
    #allocation3 [shape = 'u8[512]{0}', space=vmem, size = 0x400, scoped, tag = 'output window, operand 0, single buffered']
    #allocation4 [shape = 's32[1]{0}', space=sflag, size = 0x4, scoped, tag = 'scoped memory for loan_matching_forward.1']
    %13 = vsyncpa [#allocation4], 0
    // Predicated region
    $region2: #{loan_matching_forward.1} parent=1 // pred_check
      _
    $region3: #{loan_matching_forward.1} parent=1 // pred_check_branch
      %15 = sbr.rel (0) target = $region5
    $region4: #{loan_matching_forward.1} parent=1 // pred_region
      _
    $region5: #{loan_matching_forward.1} parent=1 // pred_fallthru
      _
    // Predicated region
    $region6: #{loan_matching_forward.1} parent=1 // pred_check
      _
    $region7: #{loan_matching_forward.1} parent=1 // pred_check_branch
      %17 = sbr.rel (0) target = $region9
    $region8: #{loan_matching_forward.1} parent=1 // pred_region
      _
    $region9: #{loan_matching_forward.1} parent=1 // pred_fallthru
      _
    // Predicated region
    $region10: #{loan_matching_forward.1} parent=1 // pred_check
      _
    $region11: #{loan_matching_forward.1} parent=1 // pred_check_branch
      %19 = sbr.rel (0) target = $region13
    $region12: #{loan_matching_forward.1} parent=1 // pred_region
      _
    $region13: #{loan_matching_forward.1} parent=1 // pred_fallthru
      _
    // Predicated region
    $region14: #{loan_matching_forward.1} parent=1 // pred_check
      _
    $region15: #{loan_matching_forward.1} parent=1 // pred_check_branch
      %21 = sbr.rel (0) target = $region17
    $region16: #{loan_matching_forward.1} parent=1 // pred_region
      _
    $region17: #{loan_matching_forward.1} parent=1 // pred_fallthru
      _
    // Predicated region
    $region18: #{loan_matching_forward.1} parent=1 // pred_check
      _
    $region19: #{loan_matching_forward.1} parent=1 // pred_check_branch
      %23 = sbr.rel (0) target = $region21
    $region20: #{loan_matching_forward.1} parent=1 // pred_region
      _
    $region21: #{loan_matching_forward.1} parent=1 // pred_fallthru
      _
    // Predicated region
    $region22: #{loan_matching_forward.1} parent=1 // pred_check
      _
    $region23: #{loan_matching_forward.1} parent=1 // pred_check_branch
      %25 = sbr.rel (0) target = $region25
    $region24: #{loan_matching_forward.1} parent=1 // pred_region
      _
    $region25: #{loan_matching_forward.1} parent=1 // pred_fallthru
      _
    // Predicated region
    $region26: #{loan_matching_forward.1} parent=1 // pred_check
      _
    $region27: #{loan_matching_forward.1} parent=1 // pred_check_branch
      %27 = sbr.rel (0) target = $region29
    $region28: #{loan_matching_forward.1} parent=1 // pred_region
      _
    $region29: #{loan_matching_forward.1} parent=1 // pred_fallthru
      _
    %v28 = vld [vmem:[%s0] sm:$0xff]
    %v29 = vld [vmem:[%s0 + $0x8] sm:$0xff]
    %v30 = vld [vmem:[%s0 + $0x10] sm:$0xff]
    %v31 = vld [vmem:[%s0 + $0x18] sm:$0xff]
    %v32 = vld [vmem:[%s0 + $0x20] sm:$0xff]
    %v33 = vld [vmem:[%s0 + $0x28] sm:$0xff]
    %v34 = vld [vmem:[%s0 + $0x30] sm:$0xff]
    %v35 = vld [vmem:[%s0 + $0x38] sm:$0xff]
    %v36 = vld [vmem:[%s0 + $0x40] sm:$0xff]
    %v37 = vld [vmem:[%s0 + $0x48] sm:$0xff]
    %v38 = vld [vmem:[%s0 + $0x50] sm:$0xff]
    %v39 = vld [vmem:[%s0 + $0x58] sm:$0xff]
    %v40 = vld [vmem:[%s0 + $0x60] sm:$0xff]
    %v41 = vld [vmem:[%s0 + $0x68] sm:$0xff]
    %v42 = vld [vmem:[%s0 + $0x70] sm:$0xff]
    %v43 = vld [vmem:[%s0 + $0x78] sm:$0xff]
    %v44 = vld [vmem:[%s1] sm:$0xff]
    %v45 = vld [vmem:[%s1 + $0x8] sm:$0xff]
    %v46 = vld [vmem:[%s1 + $0x10] sm:$0xff]
    %v47 = vld [vmem:[%s1 + $0x18] sm:$0xff]
    %v48 = vld [vmem:[%s2] sm:$0xff]
    %v49 = vld [vmem:[%s2 + $0x8] sm:$0xff]
    %v50 = vld [vmem:[%s2 + $0x10] sm:$0xff]
    %v51 = vld [vmem:[%s2 + $0x18] sm:$0xff]
    %53 = vset.pattern.permute.xlu0 0
    %54 = vperm.xlu0 %53, %v48
    %v55 = vpop.permute.xlu0 %54
    %58 = vset.pattern.permute.xlu0 0
    %59 = vperm.xlu0 %58, %v49
    %v60 = vpop.permute.xlu0 %59
    %63 = vset.pattern.permute.xlu0 0
    %64 = vperm.xlu0 %63, %v50
    %v65 = vpop.permute.xlu0 %64
    %68 = vset.pattern.permute.xlu0 0
    %69 = vperm.xlu0 %68, %v51
    %v70 = vpop.permute.xlu0 %69
    %vm72 = vcmask 130048
    %v74 = vsel %vm72, %v44, 0
    %v77 = vsel %vm72, %v45, 0
    %v80 = vsel %vm72, %v46, 0
    %v83 = vsel %vm72, %v47, 0
    %v86 = vsel %vm72, %v28, 0
    %v89 = vsel %vm72, %v29, 0
    %v92 = vsel %vm72, %v30, 0
    %v95 = vsel %vm72, %v31, 0
    %v98 = vsel %vm72, %v32, 0
    %v101 = vsel %vm72, %v33, 0
    %v104 = vsel %vm72, %v34, 0
    %v107 = vsel %vm72, %v35, 0
    %v110 = vsel %vm72, %v36, 0
    %v113 = vsel %vm72, %v37, 0
    %v116 = vsel %vm72, %v38, 0
    %v119 = vsel %vm72, %v39, 0
    %v122 = vsel %vm72, %v40, 0
    %v125 = vsel %vm72, %v41, 0
    %v128 = vsel %vm72, %v42, 0
    %v131 = vsel %vm72, %v43, 0
    %133 = vmatpush.xpose.msra.mxu0 %v131
    %134 = vmatpush.xpose.msra.mxu0 %v128
    %135 = vmatpush.xpose.msra.mxu0 %v125
    %136 = vmatpush.xpose.msra.mxu0 %v122
    %137 = vmatpush.xpose.msra.mxu0 %v119
    %138 = vmatpush.xpose.msra.mxu0 %v116
    %139 = vmatpush.xpose.msra.mxu0 %v113
    %140 = vmatpush.xpose.msra.mxu0 %v110
    %141 = vmatpush.xpose.msra.mxu0 %v107
    %142 = vmatpush.xpose.msra.mxu0 %v104
    %143 = vmatpush.xpose.msra.mxu0 %v101
    %144 = vmatpush.xpose.msra.mxu0 %v98
    %145 = vmatpush.xpose.msra.mxu0 %v95
    %146 = vmatpush.xpose.msra.mxu0 %v92
    %147 = vmatpush.xpose.msra.mxu0 %v89
    %148 = vmatpush.xpose.msra.mxu0 %v86
    %149 = vmatmul.f32.gmra.mxu0 %v74
    %v150 = vpop.f32.mrf.mxu0
    %v151 = vadd.f32 %v55, %v150
    %152 = vmatmul.f32.gmra.mxu0 %v77
    %v153 = vpop.f32.mrf.mxu0
    %v154 = vadd.f32 %v60, %v153
    %155 = vmatmul.f32.gmra.mxu0 %v80
    %v156 = vpop.f32.mrf.mxu0
    %v157 = vadd.f32 %v65, %v156
    %158 = vmatmul.f32.gmra.mxu0 %v83
    %v159 = vpop.f32.mrf.mxu0
    %v160 = vadd.f32 %v70, %v159
    %161 = vdwg.mxu0
    %v162 = vmax.f32 %v151, 0.0
    %v163 = vmax.f32 %v154, 0.0
    %v164 = vmax.f32 %v157, 0.0
    %v165 = vmax.f32 %v160, 0.0
    %v166 = vld [vmem:[%s3] sm:$0xff]
    %v167 = vld [vmem:[%s3 + $0x8] sm:$0xff]
    %v168 = vld [vmem:[%s4] sm:$0xff]
    %v169 = vld [vmem:[%s4 + $0x8] sm:$0xff]
    %171 = vset.pattern.permute.xlu0 0
    %172 = vperm.xlu0 %171, %v168
    %v173 = vpop.permute.xlu0 %172
    %176 = vset.pattern.permute.xlu0 0
    %177 = vperm.xlu0 %176, %v169
    %v178 = vpop.permute.xlu0 %177
    %vm180 = vcmask 261120
    %v182 = vsel %vm180, %v166, 0
    %v185 = vsel %vm180, %v167, 0
    %187 = vmatpush.msra.mxu0 0.0
    %188 = vmatpush.msra.mxu0 0.0
    %189 = vmatpush.msra.mxu0 0.0
    %190 = vmatpush.msra.mxu0 0.0
    %191 = vmatpush.msra.mxu0 0.0
    %192 = vmatpush.msra.mxu0 0.0
    %193 = vmatpush.msra.mxu0 0.0
    %194 = vmatpush.msra.mxu0 0.0
    %195 = vmatpush.msra.mxu0 0.0
    %196 = vmatpush.msra.mxu0 0.0
    %197 = vmatpush.msra.mxu0 0.0
    %198 = vmatpush.msra.mxu0 0.0
    %199 = vmatpush.msra.mxu0 %v165
    %200 = vmatpush.msra.mxu0 %v164
    %201 = vmatpush.msra.mxu0 %v163
    %202 = vmatpush.msra.mxu0 %v162
    %203 = vmatmul.f32.gmra.mxu0 %v182
    %v204 = vpop.f32.mrf.mxu0
    %v205 = vadd.f32 %v173, %v204
    %206 = vmatmul.f32.gmra.mxu0 %v185
    %v207 = vpop.f32.mrf.mxu0
    %v208 = vadd.f32 %v178, %v207
    %209 = vdwg.mxu0
    %v210 = vmax.f32 %v205, 0.0
    %v211 = vmax.f32 %v208, 0.0
    %v212 = vld [vmem:[%s5] sm:$0xff]
    %v213 = vld [vmem:[%s5 + $0x8] sm:$0xff]
    %215 = vset.pattern.permute.xlu0 0
    %216 = vperm.xlu0 %215, %v212
    %v217 = vpop.permute.xlu0 %216
    %220 = vset.pattern.permute.xlu0 0
    %221 = vperm.xlu0 %220, %v213
    %v222 = vpop.permute.xlu0 %221
    %v224 = vmul.f32 %v210, %v217
    %v225 = vmul.f32 %v211, %v222
    %v226 = vadd.f32 %v224, %v225
    %v227 = vrot.slane %v226, 4
    %v228 = vadd.f32 %v226, %v227
    %v229 = vrot.slane %v228, 2
    %v230 = vadd.f32 %v228, %v229
    %v231 = vrot.slane %v230, 1
    %v232 = vadd.f32 %v230, %v231
    %s233 = sld [smem:[#allocation2]]
    %v234 = vstv %s233
    %v235 = vadd.f32 %v232, %v234
    %v236 = vxor.u32 %v235, 2147483648
    %v237 = vmul.f32 %v236, 1.442695
    %v238 = vpow.pop %v237
    %v239 = vadd.f32 %v238, 1.0
    %v240 = vrcp.pop %v239
    %v241 = vmul.f32 %v239, %v240
    %v242 = vsub.f32 1.0, %v241
    %v243 = vmul.f32 %v240, %v242
    %v244 = vadd.f32 %v240, %v243
    %vm245 = vweird.f32 %v239
    %vm246 = vweird.f32 %v240
    %vm247 = vmor %vm245, %vm246
    %v248 = vsel %vm247, %v240, %v244
    %v249 = vand.u32 2147483647, %v239
    %vm250 = vcmp.eq.f32.partialorder %v249, 8.507059e+37
    %v251 = vand.u32 %v239, 2147483648
    %v252 = vor.u32 1.1754944e-38, %v251
    %v253 = vsel %vm250, %v252, %v248
    %v254 = vmul.f32 1.0, %v253
    %255 = vst [vmem:[#allocation3] sm:$0x1] %v254
    // Predicated region
    $region30: #{loan_matching_forward.1} parent=1 // pred_check
      _
    $region31: #{loan_matching_forward.1} parent=1 // pred_check_branch
      %257 = sbr.rel (0) target = $region33
    $region32: #{loan_matching_forward.1} parent=1 // pred_region
      %259 = vsyncadd [#allocation4], 0
      %s261 = sshll.u32 [#allocation3], 4
      %s262 = int_to_ptr.vmem [resolvable:$true] %s261
      %s263 = sshll.u32 %s7, 4
      %s264 = int_to_ptr.hbm [resolvable:$true] %s263
      %266 = dma.vmem_to_hbm [thread:$0]  %s262, 16, %s264, [#allocation4]
    $region33: #{loan_matching_forward.1} parent=1 // pred_fallthru
      _
    // Predicated region
    $region34: #{loan_matching_forward.1} parent=1 // pred_check
      _
    $region35: #{loan_matching_forward.1} parent=1 // pred_check_branch
      %268 = sbr.rel (0) target = $region37
    $region36: #{loan_matching_forward.1} parent=1 // pred_region
      %270 = dma.done [#allocation4], 16
    $region37: #{loan_matching_forward.1} parent=1 // pred_fallthru
      _
    %271 = vsyncpa [#allocation4], 1

</llo_original>
